<compile_context>
chip_gen: v5e
topology: v5e:2x2
jax: 0.10.0
libtpu: 0.0.40
codegen_flags: <defaults>
</compile_context>

<pallas_src>
import functools

import jax
import jax.numpy as jnp
from jax.experimental import pallas as pl
from jax.experimental.pallas import tpu as pltpu

_VMEM_LIMIT = 48 * 1024 * 1024      # <= 64 MiB physical on v7x
_TILE_BUDGET = 40 * 1024 * 1024     # working-set budget used to derive tiles
_SENTINEL = 1e30                    # padded-candidate sentinel (=> exp -> 0)


def _round_up(x, m):
    return ((x + m - 1) // m) * m


def _pick_row_tiling(n, tile_n):
    """Row tile + padded row count.  Ensures >= 2 row tiles whenever there is
    enough work, because the row axis is 'parallel' and v7x has 2 TCs."""
    n8 = _round_up(max(n, 1), 8)
    tile_n = max(8, _round_up(tile_n, 8))
    if n8 <= 8:
        return 8, 8
    n_tiles = max(2, -(-n8 // tile_n))
    tq = _round_up(-(-n8 // n_tiles), 8)
    return tq, tq * n_tiles


def _pick_cand_tile(cand_tile, m, d, tq, dout_pad, budget_bytes=_TILE_BUDGET):
    """Candidate lane tile: multiple of 128, capped so double-buffered blocks
    (ct, y, x, out) plus the VMEM scratch fit the budget even at large D."""
    fixed = 4 * (2 * tq * d + 3 * tq * dout_pad + tq)
    per_mt = 4 * (2 * d + 2 * dout_pad + tq)
    cap = max(128, ((budget_bytes - fixed) // per_mt) // 128 * 128)
    mt = min(cand_tile, cap, _round_up(m, 128))
    return max(128, mt)


# ----------------------------------------------------------------------------
# Pallas kernels
# ----------------------------------------------------------------------------
def encode_rows_kernel(*refs, n_num, n_bins, has_cat):
    # Query encode, row-major: x_num (TN, F), [x_cat (TN, C)], u (F, B),
    # inv_delta (F, B) -> out (TN, D).
    if has_cat:
        x_ref, cat_ref, u_ref, inv_ref, o_ref = refs
    else:
        x_ref, u_ref, inv_ref, o_ref = refs
        cat_ref = None
    for j in range(n_num):
        xj = x_ref[:, j:j + 1]                       # (TN, 1)
        uj = u_ref[j:j + 1, :]                       # (1, B)
        ij = inv_ref[j:j + 1, :]                     # (1, B)
        # ceil((x - u*delta)/delta) == ceil(x*inv_delta - u); divide hoisted.
        o_ref[:, j * n_bins:(j + 1) * n_bins] = jnp.ceil(xj * ij - uj)
    # TODO(synk): query-encode stores are n_bins-wide and lane-misaligned; a
    # lane-dense single-store variant would help, but the query encode is
    # negligible next to the O(N*M*D) NCA pass (candidates use the transposed
    # lane-dense encode below).
    if has_cat:
        o_ref[:, n_num * n_bins:] = cat_ref[...]


def encode_t_kernel(*refs, n_num, n_bins, has_cat):
    # Candidate encode directly in transposed layout: cT (F, MT),
    # [catT (C, MT)], u_T (B, F), inv_T (B, F) -> out (D, MT).
    # Candidates live on the lane axis, so every store is full-lane-width.
    if has_cat:
        cnum_ref, ccat_ref, u_t_ref, inv_t_ref, o_ref = refs
    else:
        cnum_ref, u_t_ref, inv_t_ref, o_ref = refs
        ccat_ref = None
    for j in range(n_num):
        row = cnum_ref[j:j + 1, :]                   # (1, MT)
        inv_col = inv_t_ref[:, j:j + 1]              # (B, 1)
        u_col = u_t_ref[:, j:j + 1]                  # (B, 1)
        o_ref[j * n_bins:(j + 1) * n_bins, :] = jnp.ceil(row * inv_col - u_col)
    if has_cat:
        o_ref[n_num * n_bins:, :] = ccat_ref[...]


def nca_kernel(x_ref, ct_ref, y_ref, o_ref, neg_ref, acc_ref, m_ref, *,
               inv_temp, rs, sum_col):
    # x_ref:  (TN, D)        query features (rows on sublanes)
    # ct_ref: (D, MT)        candidate features, transposed (cands on lanes)
    # y_ref:  (MT, DOUT_P)   one-hot labels + ones column at `sum_col`
    # o_ref:  (TN, DOUT_P)   logits (written on the last candidate tile)
    # scratch: neg_ref (TN, MT); acc_ref (TN, DOUT_P); m_ref (TN, 1)
    k = pl.program_id(1)
    tn, d = x_ref.shape
    mt = ct_ref.shape[1]

    @pl.when(k == 0)
    def _init():
        acc_ref[...] = jnp.zeros_like(acc_ref)
        m_ref[...] = jnp.full_like(m_ref, -jnp.inf)

    # Register-blocked L1 distances.  The (rs, 128) partial stays resident in
    # vregs across the whole static feature loop; one aligned store per
    # sub-block (no per-feature VMEM round-trips of the accumulator).
    for c0 in range(0, mt, 128):
        for r0 in range(0, tn, rs):
            part = jnp.zeros((rs, 128), jnp.float32)
            for j in range(d):                       # static trip count
                part = part + jnp.abs(x_ref[r0:r0 + rs, j:j + 1]
                                      - ct_ref[j:j + 1, c0:c0 + 128])
            neg_ref[r0:r0 + rs, c0:c0 + 128] = part * (-inv_temp)

    neg = neg_ref[...]
    m_k = jnp.max(neg, axis=1, keepdims=True)        # (TN, 1)
    m_new = jnp.maximum(m_ref[...], m_k)
    alpha = jnp.exp(m_ref[...] - m_new)              # (TN, 1)
    p = jnp.exp(neg - m_new)                         # sentinel cols -> exactly 0

    # Flash-style rescaled accumulation; the ones column of y makes the MXU
    # matmul also produce the softmax denominator (no cross-lane reduce).
    acc_ref[...] = acc_ref[...] * alpha + jnp.dot(
        p, y_ref[...], preferred_element_type=jnp.float32)
    m_ref[...] = m_new

    @pl.when(k == pl.num_programs(1) - 1)
    def _finalize():
        m = m_ref[...]
        lse = m + jnp.log(acc_ref[:, sum_col:sum_col + 1])
        logits = acc_ref[...] * jnp.exp(m)           # un-rescale once
        o_ref[...] = jnp.log(logits + 1e-8) - lse


# ----------------------------------------------------------------------------
# Wrappers
# ----------------------------------------------------------------------------
def encode_rows(x_num, x_cat, u, inv_delta, *, tq, n_pad):
    """Fused feature map + flatten (+ categorical concat) for query rows."""
    n, f = x_num.shape
    b = u.shape[1]
    c = 0 if x_cat is None else x_cat.shape[1]
    d = f * b + c

    x_p = jnp.pad(x_num.astype(jnp.float32), ((0, n_pad - n), (0, 0)))
    inputs = [x_p]
    in_specs = [pl.BlockSpec((tq, f), lambda i: (i, 0))]
    if c:
        cat_p = jnp.pad(x_cat.astype(jnp.float32), ((0, n_pad - n), (0, 0)))
        inputs.append(cat_p)
        in_specs.append(pl.BlockSpec((tq, c), lambda i: (i, 0)))
    inputs += [u, inv_delta]
    in_specs += [pl.BlockSpec((f, b), lambda i: (0, 0)),
                 pl.BlockSpec((f, b), lambda i: (0, 0))]

    return pl.pallas_call(
        functools.partial(encode_rows_kernel, n_num=f, n_bins=b,
                          has_cat=bool(c)),
        out_shape=jax.ShapeDtypeStruct((n_pad, d), jnp.float32),
        grid=(n_pad // tq,),
        in_specs=in_specs,
        out_specs=pl.BlockSpec((tq, d), lambda i: (i, 0)),
        compiler_params=pltpu.CompilerParams(
            dimension_semantics=("parallel",),
            vmem_limit_bytes=_VMEM_LIMIT),
    )(*inputs)


def encode_candidates_t(c_num, c_cat, u_t, inv_t, *, mt, m_pad):
    """Candidate encode, directly in transposed (D, m_pad) layout.

    Padded candidate columns are filled with a huge sentinel so their encoded
    features (hence L1 distances) are enormous and exp() underflows to exactly
    0 in the NCA kernel — this replaces the per-tile padding mask.
    """
    m, f = c_num.shape
    b = u_t.shape[0]
    c = 0 if c_cat is None else c_cat.shape[1]
    d = f * b + c

    cnum_t = jnp.pad(c_num.T.astype(jnp.float32), ((0, 0), (0, m_pad - m)),
                     constant_values=_SENTINEL)
    inputs = [cnum_t]
    in_specs = [pl.BlockSpec((f, mt), lambda i: (0, i))]
    if c:
        ccat_t = jnp.pad(c_cat.T.astype(jnp.float32), ((0, 0), (0, m_pad - m)))
        inputs.append(ccat_t)
        in_specs.append(pl.BlockSpec((c, mt), lambda i: (0, i)))
    inputs += [u_t, inv_t]
    in_specs += [pl.BlockSpec((b, f), lambda i: (0, 0)),
                 pl.BlockSpec((b, f), lambda i: (0, 0))]

    return pl.pallas_call(
        functools.partial(encode_t_kernel, n_num=f, n_bins=b, has_cat=bool(c)),
        out_shape=jax.ShapeDtypeStruct((d, m_pad), jnp.float32),
        grid=(m_pad // mt,),
        in_specs=in_specs,
        out_specs=pl.BlockSpec((d, mt), lambda i: (0, i)),
        compiler_params=pltpu.CompilerParams(
            dimension_semantics=("parallel",),
            vmem_limit_bytes=_VMEM_LIMIT),
    )(*inputs)


def kernel_nca_forward(x_num, x_cat, candidate_x_num, candidate_x_cat,
                       candidate_y, params, *, d_out, temperature=1.0,
                       tile_n=256, cand_tile=1024):
    """Forward pass of KernelNCA.  Returns (N, d_out) logits."""
    assert cand_tile % 128 == 0
    u = params["u"].astype(jnp.float32)
    delta = params["delta"].astype(jnp.float32)
    inv_delta = 1.0 / delta

    n, f = x_num.shape
    m = candidate_x_num.shape[0]
    b = u.shape[1]
    c = 0 if x_cat is None else x_cat.shape[1]
    d = f * b + c

    n_label = d_out if d_out > 1 else 1
    sum_col = n_label                       # index of the extra ones column
    dout_pad = _round_up(n_label + 1, 128)  # lane-dense output / labels

    # Row tiling: >= 2 'parallel' row tiles when possible (v7x has 2 TCs).
    tq, n_pad = _pick_row_tiling(n, tile_n)
    rs = max(r for r in (64, 32, 16, 8) if tq % r == 0)

    # Candidate lane tile: multiple of 128, VMEM/D-aware.
    mt = _pick_cand_tile(cand_tile, m, d, tq, dout_pad)
    m_pad = _round_up(m, mt)

    # Encodings (queries row-major, candidates directly transposed).
    x_enc = encode_rows(x_num, x_cat, u, inv_delta, tq=tq, n_pad=n_pad)
    ct = encode_candidates_t(candidate_x_num, candidate_x_cat,
                             jnp.transpose(u), jnp.transpose(inv_delta),
                             mt=mt, m_pad=m_pad)

    # Labels + ones column (MXU-produced softmax denominator), lane-padded.
    if d_out > 1:
        y = jax.nn.one_hot(candidate_y, d_out, dtype=jnp.float32)
    else:
        y = candidate_y.reshape(-1, 1).astype(jnp.float32)
    y_aug = jnp.concatenate([y, jnp.ones((m, 1), jnp.float32)], axis=1)
    y_p = jnp.pad(y_aug, ((0, m_pad - m), (0, dout_pad - (n_label + 1))))

    grid = (n_pad // tq, m_pad // mt)
    out = pl.pallas_call(
        functools.partial(nca_kernel,
                          inv_temp=float(1.0 / temperature),
                          rs=rs, sum_col=sum_col),
        out_shape=jax.ShapeDtypeStruct((n_pad, dout_pad), jnp.float32),
        grid=grid,
        in_specs=[
            pl.BlockSpec((tq, d), lambda i, k: (i, 0)),
            pl.BlockSpec((d, mt), lambda i, k: (0, k)),
            pl.BlockSpec((mt, dout_pad), lambda i, k: (k, 0)),
        ],
        out_specs=pl.BlockSpec((tq, dout_pad), lambda i, k: (i, 0)),
        scratch_shapes=[
            pltpu.VMEM((tq, mt), jnp.float32),        # neg (scaled distances)
            pltpu.VMEM((tq, dout_pad), jnp.float32),  # rescaled logits acc
            pltpu.VMEM((tq, 1), jnp.float32),         # running max
        ],
        compiler_params=pltpu.CompilerParams(
            dimension_semantics=("parallel", "arbitrary"),
            vmem_limit_bytes=_VMEM_LIMIT),
    )(x_enc, ct, y_p)
    # TODO(synk): for M > 1000 the PyTorch reference SUMS per-1000-row-chunk
    # logsumexps; this kernel computes the global logsumexp (identical for
    # M <= 1000, which is the documented guarantee).
    return out[:n, :d_out]


# ----------------------------------------------------------------------------
# Pure-JAX reference (mirrors the PyTorch forward for a single candidate chunk)
# ----------------------------------------------------------------------------
def reference_forward(x_num, x_cat, cand_x_num, cand_x_cat, cand_y,
                      u, delta, d_out, temperature):
    inv_delta = 1.0 / delta

    def fm(x):  # == ceil((x - u*delta)/delta) with the divide hoisted
        z = jnp.ceil(x[:, :, None] * inv_delta[None] - u[None])
        return z.reshape(x.shape[0], -1)

    xe = fm(x_num)
    ce = fm(cand_x_num)
    if x_cat is not None:
        xe = jnp.concatenate([xe, x_cat.astype(jnp.float32)], axis=1)
    if cand_x_cat is not None:
        ce = jnp.concatenate([ce, cand_x_cat.astype(jnp.float32)], axis=1)
    if d_out > 1:
        y = jax.nn.one_hot(cand_y, d_out, dtype=jnp.float32)
    else:
        y = cand_y.reshape(-1, 1).astype(jnp.float32)
    dist = jnp.sum(jnp.abs(xe[:, None, :] - ce[None]), axis=-1) / temperature
    lse = jax.scipy.special.logsumexp(-dist, axis=1)
    logits = jnp.exp(-dist) @ y
    return jnp.log(logits + 1e-8) - lse[:, None]


# ----------------------------------------------------------------------------
if __name__ == "__main__":
    d_in_num, d_in_cat, d_out, n_bins = 4, 4, 3, 50
    delta_scale, temperature = 60.0, 1.0

    key = jax.random.PRNGKey(0)
    kd_, ku_, kdata = jax.random.split(key, 3)

    # Parameters (shapes from __init__); clamp_delta() defaults applied.
    delta = jnp.clip(jax.random.uniform(kd_, (d_in_num, n_bins)) * delta_scale,
                     30.0, 100.0).astype(jnp.float32)
    u = jax.random.uniform(ku_, (d_in_num, n_bins), dtype=jnp.float32)
    params = {"u": u, "delta": delta}
    # note: `factor` and `beta` from __init__ are unused in forward().

    def run_case(n, m, tile_n, cand_tile):
        ks = jax.random.split(jax.random.fold_in(kdata, n * 1000 + m), 5)
        x_num = jax.random.normal(ks[0], (n, d_in_num), dtype=jnp.float32) * 10.0
        x_cat = (jax.random.uniform(ks[1], (n, d_in_cat)) < 0.5).astype(jnp.float32)
        c_num = jax.random.normal(ks[2], (m, d_in_num), dtype=jnp.float32) * 10.0
        c_cat = (jax.random.uniform(ks[3], (m, d_in_cat)) < 0.5).astype(jnp.float32)
        c_y = jax.random.randint(ks[4], (m,), 0, d_out)

        out = kernel_nca_forward(x_num, x_cat, c_num, c_cat, c_y, params,
                                 d_out=d_out, temperature=temperature,
                                 tile_n=tile_n, cand_tile=cand_tile)
        out = jax.block_until_ready(out)
        ref = reference_forward(x_num, x_cat, c_num, c_cat, c_y,
                                u, delta, d_out, temperature)
        assert out.shape == (n, d_out), out.shape
        err = float(jnp.max(jnp.abs(out - ref)))
        assert jnp.allclose(out, ref, atol=1e-4, rtol=1e-4), err

    run_case(8, 16, tile_n=256, cand_tile=1024)    # single row / candidate tile
    run_case(24, 300, tile_n=16, cand_tile=128)    # multi-tile + sentinel pad
    run_case(40, 200, tile_n=256, cand_tile=256)   # multiple (rs,128) sub-blocks
    print("KERNEL_OK")
</pallas_src>

<mosaic_0001>
module attributes {stable_mosaic.version = 11 : i64} {
  func.func @encode_rows_kernel(%arg0: i32, %arg1: memref<8x4xf32, #tpu.memory_space<vmem>>, %arg2: memref<8x4xf32, #tpu.memory_space<vmem>>, %arg3: memref<4x50xf32, #tpu.memory_space<vmem>>, %arg4: memref<4x50xf32, #tpu.memory_space<vmem>>, %arg5: memref<8x204xf32, #tpu.memory_space<vmem>>) attributes {dimension_semantics = [#tpu.dimension_semantics<parallel>], iteration_bounds = array<i64: 1>, scalar_prefetch = 0 : i64, scratch_operands = 0 : i64, tpu.core_type = #tpu.core_type<tc>, window_params = [{transform_indices = @transform_0, window_bounds = array<i64: 8, 4>}, {transform_indices = @transform_1, window_bounds = array<i64: 8, 4>}, {pipeline_mode = #tpu.pipeline_mode<synchronous>, transform_indices = @transform_2, window_bounds = array<i64: 4, 50>}, {pipeline_mode = #tpu.pipeline_mode<synchronous>, transform_indices = @transform_3, window_bounds = array<i64: 4, 50>}, {transform_indices = @transform_4, window_bounds = array<i64: 8, 204>}]} {
    %c0 = arith.constant 0 : index
    %c0_0 = arith.constant 0 : index
    %0 = vector.load %arg1[%c0, %c0_0] : memref<8x4xf32, #tpu.memory_space<vmem>>, vector<8x1xf32>
    %c0_1 = arith.constant 0 : index
    %c0_2 = arith.constant 0 : index
    %1 = vector.load %arg3[%c0_1, %c0_2] : memref<4x50xf32, #tpu.memory_space<vmem>>, vector<1x50xf32>
    %c0_3 = arith.constant 0 : index
    %c0_4 = arith.constant 0 : index
    %2 = vector.load %arg4[%c0_3, %c0_4] : memref<4x50xf32, #tpu.memory_space<vmem>>, vector<1x50xf32>
    %3 = vector.broadcast %0 : vector<8x1xf32> to vector<8x50xf32>
    %4 = vector.broadcast %2 : vector<1x50xf32> to vector<8x50xf32>
    %5 = arith.mulf %3, %4 : vector<8x50xf32>
    %6 = vector.broadcast %1 : vector<1x50xf32> to vector<8x50xf32>
    %7 = arith.subf %5, %6 : vector<8x50xf32>
    %8 = math.ceil %7 : vector<8x50xf32>
    %c0_5 = arith.constant 0 : index
    %c0_6 = arith.constant 0 : index
    %9 = vector.load %arg5[%c0_5, %c0_6] : memref<8x204xf32, #tpu.memory_space<vmem>>, vector<8x50xf32>
    tpu.vector_store %arg5[%c0_5, %c0_6], %8 {strides = array<i32>} : memref<8x204xf32, #tpu.memory_space<vmem>>, vector<8x50xf32>,
    %c0_7 = arith.constant 0 : index
    %c1 = arith.constant 1 : index
    %10 = vector.load %arg1[%c0_7, %c1] : memref<8x4xf32, #tpu.memory_space<vmem>>, vector<8x1xf32>
    %c1_8 = arith.constant 1 : index
    %c0_9 = arith.constant 0 : index
    %11 = vector.load %arg3[%c1_8, %c0_9] : memref<4x50xf32, #tpu.memory_space<vmem>>, vector<1x50xf32>
    %c1_10 = arith.constant 1 : index
    %c0_11 = arith.constant 0 : index
    %12 = vector.load %arg4[%c1_10, %c0_11] : memref<4x50xf32, #tpu.memory_space<vmem>>, vector<1x50xf32>
    %13 = vector.broadcast %10 : vector<8x1xf32> to vector<8x50xf32>
    %14 = vector.broadcast %12 : vector<1x50xf32> to vector<8x50xf32>
    %15 = arith.mulf %13, %14 : vector<8x50xf32>
    %16 = vector.broadcast %11 : vector<1x50xf32> to vector<8x50xf32>
    %17 = arith.subf %15, %16 : vector<8x50xf32>
    %18 = math.ceil %17 : vector<8x50xf32>
    %c0_12 = arith.constant 0 : index
    %c50 = arith.constant 50 : index
    %19 = vector.load %arg5[%c0_12, %c50] : memref<8x204xf32, #tpu.memory_space<vmem>>, vector<8x50xf32>
    tpu.vector_store %arg5[%c0_12, %c50], %18 {strides = array<i32>} : memref<8x204xf32, #tpu.memory_space<vmem>>, vector<8x50xf32>,
    %c0_13 = arith.constant 0 : index
    %c2 = arith.constant 2 : index
    %20 = vector.load %arg1[%c0_13, %c2] : memref<8x4xf32, #tpu.memory_space<vmem>>, vector<8x1xf32>
    %c2_14 = arith.constant 2 : index
    %c0_15 = arith.constant 0 : index
    %21 = vector.load %arg3[%c2_14, %c0_15] : memref<4x50xf32, #tpu.memory_space<vmem>>, vector<1x50xf32>
    %c2_16 = arith.constant 2 : index
    %c0_17 = arith.constant 0 : index
    %22 = vector.load %arg4[%c2_16, %c0_17] : memref<4x50xf32, #tpu.memory_space<vmem>>, vector<1x50xf32>
    %23 = vector.broadcast %20 : vector<8x1xf32> to vector<8x50xf32>
    %24 = vector.broadcast %22 : vector<1x50xf32> to vector<8x50xf32>
    %25 = arith.mulf %23, %24 : vector<8x50xf32>
    %26 = vector.broadcast %21 : vector<1x50xf32> to vector<8x50xf32>
    %27 = arith.subf %25, %26 : vector<8x50xf32>
    %28 = math.ceil %27 : vector<8x50xf32>
    %c0_18 = arith.constant 0 : index
    %c100 = arith.constant 100 : index
    %29 = vector.load %arg5[%c0_18, %c100] : memref<8x204xf32, #tpu.memory_space<vmem>>, vector<8x50xf32>
    tpu.vector_store %arg5[%c0_18, %c100], %28 {strides = array<i32>} : memref<8x204xf32, #tpu.memory_space<vmem>>, vector<8x50xf32>,
    %c0_19 = arith.constant 0 : index
    %c3 = arith.constant 3 : index
    %30 = vector.load %arg1[%c0_19, %c3] : memref<8x4xf32, #tpu.memory_space<vmem>>, vector<8x1xf32>
    %c3_20 = arith.constant 3 : index
    %c0_21 = arith.constant 0 : index
    %31 = vector.load %arg3[%c3_20, %c0_21] : memref<4x50xf32, #tpu.memory_space<vmem>>, vector<1x50xf32>
    %c3_22 = arith.constant 3 : index
    %c0_23 = arith.constant 0 : index
    %32 = vector.load %arg4[%c3_22, %c0_23] : memref<4x50xf32, #tpu.memory_space<vmem>>, vector<1x50xf32>
    %33 = vector.broadcast %30 : vector<8x1xf32> to vector<8x50xf32>
    %34 = vector.broadcast %32 : vector<1x50xf32> to vector<8x50xf32>
    %35 = arith.mulf %33, %34 : vector<8x50xf32>
    %36 = vector.broadcast %31 : vector<1x50xf32> to vector<8x50xf32>
    %37 = arith.subf %35, %36 : vector<8x50xf32>
    %38 = math.ceil %37 : vector<8x50xf32>
    %c0_24 = arith.constant 0 : index
    %c150 = arith.constant 150 : index
    %39 = vector.load %arg5[%c0_24, %c150] : memref<8x204xf32, #tpu.memory_space<vmem>>, vector<8x50xf32>
    tpu.vector_store %arg5[%c0_24, %c150], %38 {strides = array<i32>} : memref<8x204xf32, #tpu.memory_space<vmem>>, vector<8x50xf32>,
    %c0_25 = arith.constant 0 : index
    %c0_26 = arith.constant 0 : index
    %40 = vector.load %arg2[%c0_25, %c0_26] : memref<8x4xf32, #tpu.memory_space<vmem>>, vector<8x4xf32>
    %c0_27 = arith.constant 0 : index
    %c200 = arith.constant 200 : index
    %41 = vector.load %arg5[%c0_27, %c200] : memref<8x204xf32, #tpu.memory_space<vmem>>, vector<8x4xf32>
    tpu.vector_store %arg5[%c0_27, %c200], %40 {strides = array<i32>} : memref<8x204xf32, #tpu.memory_space<vmem>>, vector<8x4xf32>,
    return
  }
  func.func @transform_0(%arg0: i32) -> (i32, i32) {
    %c0_i32 = arith.constant 0 : i32
    %c0_i32_0 = arith.constant 0 : i32
    return %arg0, %c0_i32 : i32, i32
  }
  func.func @transform_1(%arg0: i32) -> (i32, i32) {
    %c0_i32 = arith.constant 0 : i32
    %c0_i32_0 = arith.constant 0 : i32
    return %arg0, %c0_i32 : i32, i32
  }
  func.func @transform_2(%arg0: i32) -> (i32, i32) {
    %c0_i32 = arith.constant 0 : i32
    %c0_i32_0 = arith.constant 0 : i32
    %c0_i32_1 = arith.constant 0 : i32
    return %c0_i32, %c0_i32_0 : i32, i32
  }
  func.func @transform_3(%arg0: i32) -> (i32, i32) {
    %c0_i32 = arith.constant 0 : i32
    %c0_i32_0 = arith.constant 0 : i32
    %c0_i32_1 = arith.constant 0 : i32
    return %c0_i32, %c0_i32_0 : i32, i32
  }
  func.func @transform_4(%arg0: i32) -> (i32, i32) {
    %c0_i32 = arith.constant 0 : i32
    %c0_i32_0 = arith.constant 0 : i32
    return %arg0, %c0_i32 : i32, i32
  }
}

</mosaic_0001>

<llo_original>
// kernel: tpu_custom_call.1
$region0: #{tpu_custom_call.1}
  #allocation0 [shape = 'u32[]', space=smem, size = 0x4, offset = 0x4, fixed_abs, tag = 'smem constant byte address 0x4 - core index']
  #allocation1 [shape = 'u32[72,128]{1,0:T(1,128)}', space=vmem, size = 0x9000, scoped, tag = 'internal scratch']
  %s0 = inlined_call_operand.vmem [shape: f32[8,4], index: 0, kind: input, shape index: {}]
  %s1 = inlined_call_operand.vmem [shape: f32[8,4], index: 1, kind: input, shape index: {}]
  %s2 = inlined_call_operand.vmem [shape: f32[4,50], index: 2, kind: input, shape index: {}]
  %s3 = inlined_call_operand.vmem [shape: f32[4,50], index: 3, kind: input, shape index: {}]
  %s4 = inlined_call_operand.hbm [shape: f32[8,204], index: 4, kind: output, shape index: {}]
  %s5 = sld [smem:[#allocation0]]
  $region26: #{tpu_custom_call.1} parent=0
    _
  %s7 = ssub.s32 1, %s5
  %s8 = scalar_select 0, %s7, %s5
  $region1: #{tpu_custom_call.1} parent=0
    #allocation2 [shape = 'u8[8192]{0}', space=vmem, size = 0x2000, scoped, tag = 'output window, operand 0, single buffered']
    #allocation3 [shape = 's32[1]{0}', space=sflag, size = 0x4, scoped, tag = 'scoped memory for tpu_custom_call.1']
    %9 = vsyncpa [#allocation3], 0
    // Predicated region
    $region2: #{tpu_custom_call.1} parent=1 // pred_check
      _
    $region3: #{tpu_custom_call.1} parent=1 // pred_check_branch
      %11 = sbr.rel (0) target = $region5
    $region4: #{tpu_custom_call.1} parent=1 // pred_region
      _
    $region5: #{tpu_custom_call.1} parent=1 // pred_fallthru
      _
    // Predicated region
    $region6: #{tpu_custom_call.1} parent=1 // pred_check
      _
    $region7: #{tpu_custom_call.1} parent=1 // pred_check_branch
      %13 = sbr.rel (0) target = $region9
    $region8: #{tpu_custom_call.1} parent=1 // pred_region
      _
    $region9: #{tpu_custom_call.1} parent=1 // pred_fallthru
      _
    // Predicated region
    $region10: #{tpu_custom_call.1} parent=1 // pred_check
      _
    $region11: #{tpu_custom_call.1} parent=1 // pred_check_branch
      %15 = sbr.rel (0) target = $region13
    $region12: #{tpu_custom_call.1} parent=1 // pred_region
      _
    $region13: #{tpu_custom_call.1} parent=1 // pred_fallthru
      _
    // Predicated region
    $region14: #{tpu_custom_call.1} parent=1 // pred_check
      _
    $region15: #{tpu_custom_call.1} parent=1 // pred_check_branch
      %17 = sbr.rel (0) target = $region17
    $region16: #{tpu_custom_call.1} parent=1 // pred_region
      _
    $region17: #{tpu_custom_call.1} parent=1 // pred_fallthru
      _
    %v18 = vld [vmem:[%s0] sm:$0xff]
    %v19 = vld [vmem:[%s2] sm:$0x1]
    %v20 = vld [vmem:[%s3] sm:$0x1]
    %22 = vset.pattern.permute.xlu0 0
    %23 = vperm.xlu0 %22, %v18
    %v24 = vpop.permute.xlu0 %23
    %v26 = vperm.slane %v20, 0
    %v27 = vmul.f32 %v24, %v26
    %v28 = vperm.slane %v19, 0
    %v29 = vsub.f32 %v27, %v28
    %v30 = vceil.f32 %v29
    %vm31 = vcmask 408576
    %32 = vst.msk [vmem:[#allocation2] sm:$0xff] %vm31, %v30
    %v33 = vld [vmem:[%s0] sm:$0xff]
    %v34 = vld [vmem:[%s2 + $0x1] sm:$0x1]
    %v35 = vld [vmem:[%s3 + $0x1] sm:$0x1]
    %37 = vset.pattern.permute.xlu0 1
    %38 = vperm.xlu0 %37, %v33
    %v39 = vpop.permute.xlu0 %38
    %v41 = vperm.slane %v35, 0
    %v42 = vmul.f32 %v39, %v41
    %v43 = vperm.slane %v34, 0
    %v44 = vsub.f32 %v42, %v43
    %v45 = vceil.f32 %v44
    %47 = vrot.lane.b32.xlu0 %v45, 50
    %v48 = vpop.permute.xlu0 %47
    %vm50 = vcmask 818576
    %51 = vst.msk [vmem:[#allocation2] sm:$0xff] %vm50, %v48
    %v52 = vld [vmem:[%s0] sm:$0xff]
    %v53 = vld [vmem:[%s2 + $0x2] sm:$0x1]
    %v54 = vld [vmem:[%s3 + $0x2] sm:$0x1]
    %56 = vset.pattern.permute.xlu0 2
    %57 = vperm.xlu0 %56, %v52
    %v58 = vpop.permute.xlu0 %57
    %v60 = vperm.slane %v54, 0
    %v61 = vmul.f32 %v58, %v60
    %v62 = vperm.slane %v53, 0
    %v63 = vsub.f32 %v61, %v62
    %v64 = vceil.f32 %v63
    %66 = vrot.lane.b32.xlu0 %v64, 100
    %v67 = vpop.permute.xlu0 %66
    %vm69 = vcmask 1048352
    %70 = vst.msk [vmem:[#allocation2] sm:$0xff] %vm69, %v67
    %vm71 = vcmask 179200
    %72 = vst.msk [vmem:[#allocation2 + $0x8] sm:$0xff] %vm71, %v67
    %v73 = vld [vmem:[%s0] sm:$0xff]
    %v74 = vld [vmem:[%s2 + $0x3] sm:$0x1]
    %v75 = vld [vmem:[%s3 + $0x3] sm:$0x1]
    %77 = vset.pattern.permute.xlu0 3
    %78 = vperm.xlu0 %77, %v73
    %v79 = vpop.permute.xlu0 %78
    %v81 = vperm.slane %v75, 0
    %v82 = vmul.f32 %v79, %v81
    %v83 = vperm.slane %v74, 0
    %v84 = vsub.f32 %v82, %v83
    %v85 = vceil.f32 %v84
    %87 = vrot.lane.b32.xlu0 %v85, 22
    %v88 = vpop.permute.xlu0 %87
    %vm90 = vcmask 588976
    %91 = vst.msk [vmem:[#allocation2 + $0x8] sm:$0xff] %vm90, %v88
    %v92 = vld [vmem:[%s1] sm:$0xff]
    %94 = vrot.lane.b32.xlu0 %v92, 72
    %v95 = vpop.permute.xlu0 %94
    %vm97 = vcmask 622144
    %98 = vst.msk [vmem:[#allocation2 + $0x8] sm:$0xff] %vm97, %v95
    // Predicated region
    $region18: #{tpu_custom_call.1} parent=1 // pred_check
      _
    $region19: #{tpu_custom_call.1} parent=1 // pred_check_branch
      %100 = sbr.rel (0) target = $region21
    $region20: #{tpu_custom_call.1} parent=1 // pred_region
      %102 = vsyncadd [#allocation3], 0
      %s104 = sshll.u32 [#allocation2], 4
      %s105 = int_to_ptr.vmem [resolvable:$true] %s104
      %s106 = sshll.u32 %s4, 4
      %s107 = int_to_ptr.hbm [resolvable:$true] %s106
      %109 = dma.vmem_to_hbm [thread:$0]  %s105, 256, %s107, [#allocation3]
    $region21: #{tpu_custom_call.1} parent=1 // pred_fallthru
      _
    // Predicated region
    $region22: #{tpu_custom_call.1} parent=1 // pred_check
      _
    $region23: #{tpu_custom_call.1} parent=1 // pred_check_branch
      %111 = sbr.rel (0) target = $region25
    $region24: #{tpu_custom_call.1} parent=1 // pred_region
      %113 = dma.done [#allocation3], 256
    $region25: #{tpu_custom_call.1} parent=1 // pred_fallthru
      _
    %114 = vsyncpa [#allocation3], 1

</llo_original>
